<compile_context>
chip_gen: v7x
topology: tpu7x:2x2x1
jax: 0.10.0
libtpu: 0.0.40
codegen_flags: <defaults>
</compile_context>

<pallas_src>
import functools

import jax
import jax.numpy as jnp
from jax.experimental import pallas as pl
from jax.experimental.pallas import tpu as pltpu


DIM = 9        # dwconv1 is Conv2d(9, 9) -> `input` has 9 channels -> dim == 9
RAY_C = 6      # mlp2 takes 15 = 9 (x) + 6 (rays) channels
OUT_C = 3


def _rgb_decoder_kernel(wx_ref, wr_ref, x_ref, r_ref, o_ref):
    """One (batch, pixel-tile) step of the fused forward pass.

    wx_ref: (3, 9)        fused weight acting on the input features
    wr_ref: (3, 6)        fused weight acting on the ray features
    x_ref : (1, 9, TM)    input feature pixels (channels on sublane, pixels on lane)
    r_ref : (1, 6, TM)    ray feature pixels
    o_ref : (1, 3, TM)    output rgb pixels
    """
    x = x_ref[0]            # (9, TM)
    r = r_ref[0]            # (6, TM)

    res = jnp.dot(wx_ref[...], x, preferred_element_type=jnp.float32)
    res = res + jnp.dot(wr_ref[...], r, preferred_element_type=jnp.float32)

    # sigmoid(z) = 1 / (1 + exp(-z)); exp on EUP, reciprocal on EUP (approx).
    sig = pl.reciprocal(1.0 + jnp.exp(-res), approx=True)
    o_ref[0] = sig.astype(o_ref.dtype)


@functools.partial(jax.jit, static_argnames=("tm",))
def rgb_decoder_vray_shift(inp, rays, w_dw, w1, w2, w3, *, tm=2048):
    """inp: (N, 9, H, W), rays: (N, 6, H, W).  Weights in PyTorch (out, in) layout.

    Returns (N, 3, H, W) in inp.dtype, matching the PyTorch module forward.
    """
    N, C, H, W = inp.shape
    assert C == DIM and rays.shape == (N, RAY_C, H, W)
    hw = H * W

    # ---- Fuse the bias-free linear chain into two tiny effective weights ----
    w_dw32 = w_dw.astype(jnp.float32)
    w1_32 = w1.astype(jnp.float32)
    w2_32 = w2.astype(jnp.float32)
    w3_32 = w3.astype(jnp.float32)
    w2x, w2r = w2_32[:, :DIM], w2_32[:, DIM:]        # (3, 9), (3, 6)
    w3a, w3b = w3_32[:, :OUT_C], w3_32[:, OUT_C:]    # (3, 3), (3, 3)
    wx_eff = (w3a @ w1_32 + w3b @ w2x) @ (w_dw32 + jnp.eye(DIM, dtype=jnp.float32))
    wr_eff = w3b @ w2r                                # (3, 6)

    # ---- NCHW-native (N, C, H*W) slabs: free reshapes, no transposes --------
    x3 = inp.reshape(N, DIM, hw)
    r3 = rays.reshape(N, RAY_C, hw)

    # Pixel tile: multiple of 128 lanes, or the full H*W extent.
    if tm >= hw:
        tm_eff = hw
    else:
        tm_eff = max(128, (tm // 128) * 128)
    grid = (N, pl.cdiv(hw, tm_eff))

    out = pl.pallas_call(
        _rgb_decoder_kernel,
        out_shape=jax.ShapeDtypeStruct((N, OUT_C, hw), inp.dtype),
        grid_spec=pltpu.PrefetchScalarGridSpec(
            num_scalar_prefetch=0,
            grid=grid,
            in_specs=[
                pl.BlockSpec((OUT_C, DIM), lambda n, p: (0, 0)),     # Wx_eff
                pl.BlockSpec((OUT_C, RAY_C), lambda n, p: (0, 0)),   # Wr_eff
                pl.BlockSpec((1, DIM, tm_eff), lambda n, p: (n, 0, p)),
                pl.BlockSpec((1, RAY_C, tm_eff), lambda n, p: (n, 0, p)),
            ],
            out_specs=pl.BlockSpec((1, OUT_C, tm_eff), lambda n, p: (n, 0, p)),
        ),
        compiler_params=pltpu.CompilerParams(
            dimension_semantics=("parallel", "parallel")),
    )(wx_eff, wr_eff, x3, r3)

    return out.reshape(N, OUT_C, H, W)


def _reference(inp, rays, w_dw, w1, w2, w3):
    """Pure-JAX NCHW reference (1x1 conv == einsum over channels), unfused."""
    conv1x1 = lambda x, w: jnp.einsum("nchw,oc->nohw", x, w)
    x = conv1x1(inp, w_dw) + inp
    albedo = conv1x1(x, w1)
    specular = conv1x1(jnp.concatenate([x, rays], axis=1), w2)
    final = jnp.concatenate([albedo, specular], axis=1)
    return jax.nn.sigmoid(conv1x1(final, w3))


if __name__ == "__main__":
    key = jax.random.PRNGKey(0)
    k_in, k_ray, k_dw, k1, k2, k3 = jax.random.split(key, 6)

    # Small shapes consistent with the module: 9 feature channels, 6 ray channels.
    N, H, W = 2, 16, 16
    inp = jax.random.normal(k_in, (N, DIM, H, W), dtype=jnp.float32)
    rays = jax.random.normal(k_ray, (N, RAY_C, H, W), dtype=jnp.float32)

    # Deterministic weight init (PyTorch Conv2d weight layout (out, in), 1x1, no bias).
    def init_w(k, out_c, in_c):
        bound = 1.0 / jnp.sqrt(in_c)
        return jax.random.uniform(k, (out_c, in_c), jnp.float32, -bound, bound)

    w_dw = init_w(k_dw, DIM, DIM)          # dwconv1: Conv2d(9, 9)
    w1 = init_w(k1, OUT_C, DIM)            # mlp1:    Conv2d(9, 3)
    w2 = init_w(k2, OUT_C, DIM + RAY_C)    # mlp2:    Conv2d(15, 3)
    w3 = init_w(k3, OUT_C, 2 * OUT_C)      # mlp3:    Conv2d(6, 3)

    out = rgb_decoder_vray_shift(inp, rays, w_dw, w1, w2, w3)
    out = jax.block_until_ready(out)

    ref = _reference(inp, rays, w_dw, w1, w2, w3)
    assert out.shape == (N, OUT_C, H, W)
    # Tolerance loosened vs the unfused reference: weight fusion reassociates
    # fp32 arithmetic and the approx EUP reciprocal adds ~1e-4 abs error.
    assert jnp.allclose(out, ref, atol=2e-3, rtol=2e-3), "mismatch vs reference"

    print("KERNEL_OK")
</pallas_src>

<mosaic_0001>
module attributes {stable_mosaic.version = 11 : i64} {
  func.func @_rgb_decoder_kernel(%arg0: i32, %arg1: i32, %arg2: memref<3x9xf32, #tpu.memory_space<vmem>>, %arg3: memref<3x6xf32, #tpu.memory_space<vmem>>, %arg4: memref<1x9x256xf32, #tpu.memory_space<vmem>>, %arg5: memref<1x6x256xf32, #tpu.memory_space<vmem>>, %arg6: memref<1x3x256xf32, #tpu.memory_space<vmem>>) attributes {dimension_semantics = [#tpu.dimension_semantics<parallel>, #tpu.dimension_semantics<parallel>], iteration_bounds = array<i64: 2, 1>, scalar_prefetch = 0 : i64, scratch_operands = 0 : i64, tpu.core_type = #tpu.core_type<tc>, window_params = [{pipeline_mode = #tpu.pipeline_mode<synchronous>, transform_indices = @transform_0, window_bounds = array<i64: 3, 9>}, {pipeline_mode = #tpu.pipeline_mode<synchronous>, transform_indices = @transform_1, window_bounds = array<i64: 3, 6>}, {transform_indices = @transform_2, window_bounds = array<i64: 1, 9, 256>}, {transform_indices = @transform_3, window_bounds = array<i64: 1, 6, 256>}, {transform_indices = @transform_4, window_bounds = array<i64: 1, 3, 256>}]} {
    %c0 = arith.constant 0 : index
    %c0_0 = arith.constant 0 : index
    %c0_1 = arith.constant 0 : index
    %0 = vector.load %arg4[%c0, %c0_0, %c0_1] : memref<1x9x256xf32, #tpu.memory_space<vmem>>, vector<1x9x256xf32>
    %1 = vector.shape_cast %0 : vector<1x9x256xf32> to vector<9x256xf32>
    %c0_2 = arith.constant 0 : index
    %c0_3 = arith.constant 0 : index
    %c0_4 = arith.constant 0 : index
    %2 = vector.load %arg5[%c0_2, %c0_3, %c0_4] : memref<1x6x256xf32, #tpu.memory_space<vmem>>, vector<1x6x256xf32>
    %3 = vector.shape_cast %2 : vector<1x6x256xf32> to vector<6x256xf32>
    %c0_5 = arith.constant 0 : index
    %c0_6 = arith.constant 0 : index
    %4 = vector.load %arg2[%c0_5, %c0_6] : memref<3x9xf32, #tpu.memory_space<vmem>>, vector<3x9xf32>
    %cst = arith.constant dense<0.000000e+00> : vector<3x256xf32>
    %5 = tpu.matmul %4, %1, %cst {dimension_numbers = #tpu.dot_dimension_numbers<[1], [0], [0], [1], [0, 0, 1, 1], [], []>} : vector<3x9xf32>, vector<9x256xf32>, vector<3x256xf32> -> vector<3x256xf32>
    %c0_7 = arith.constant 0 : index
    %c0_8 = arith.constant 0 : index
    %6 = vector.load %arg3[%c0_7, %c0_8] : memref<3x6xf32, #tpu.memory_space<vmem>>, vector<3x6xf32>
    %cst_9 = arith.constant dense<0.000000e+00> : vector<3x256xf32>
    %7 = tpu.matmul %6, %3, %cst_9 {dimension_numbers = #tpu.dot_dimension_numbers<[1], [0], [0], [1], [0, 0, 1, 1], [], []>} : vector<3x6xf32>, vector<6x256xf32>, vector<3x256xf32> -> vector<3x256xf32>
    %8 = arith.addf %5, %7 : vector<3x256xf32>
    %cst_10 = arith.constant 0.000000e+00 : f32
    %9 = vector.broadcast %cst_10 : f32 to vector<3x256xf32>
    %10 = arith.subf %9, %8 : vector<3x256xf32>
    %11 = math.exp %10 : vector<3x256xf32>
    %cst_11 = arith.constant 1.000000e+00 : f32
    %12 = vector.broadcast %cst_11 : f32 to vector<3x256xf32>
    %13 = arith.addf %12, %11 : vector<3x256xf32>
    %14 = tpu.reciprocal %13 {approx = true} : vector<3x256xf32> -> vector<3x256xf32>
    %c0_12 = arith.constant 0 : index
    %c0_13 = arith.constant 0 : index
    %c0_14 = arith.constant 0 : index
    %15 = vector.load %arg6[%c0_12, %c0_13, %c0_14] : memref<1x3x256xf32, #tpu.memory_space<vmem>>, vector<1x3x256xf32>
    %16 = vector.shape_cast %15 : vector<1x3x256xf32> to vector<3x256xf32>
    %17 = vector.shape_cast %14 : vector<3x256xf32> to vector<1x3x256xf32>
    tpu.vector_store %arg6[%c0_12, %c0_13, %c0_14], %17 {strides = array<i32>} : memref<1x3x256xf32, #tpu.memory_space<vmem>>, vector<1x3x256xf32>,
    return
  }
  func.func @transform_0(%arg0: i32, %arg1: i32) -> (i32, i32) {
    %c0_i32 = arith.constant 0 : i32
    %c0_i32_0 = arith.constant 0 : i32
    %c0_i32_1 = arith.constant 0 : i32
    return %c0_i32, %c0_i32_0 : i32, i32
  }
  func.func @transform_1(%arg0: i32, %arg1: i32) -> (i32, i32) {
    %c0_i32 = arith.constant 0 : i32
    %c0_i32_0 = arith.constant 0 : i32
    %c0_i32_1 = arith.constant 0 : i32
    return %c0_i32, %c0_i32_0 : i32, i32
  }
  func.func @transform_2(%arg0: i32, %arg1: i32) -> (i32, i32, i32) {
    %c0_i32 = arith.constant 0 : i32
    %c0_i32_0 = arith.constant 0 : i32
    return %arg0, %c0_i32, %arg1 : i32, i32, i32
  }
  func.func @transform_3(%arg0: i32, %arg1: i32) -> (i32, i32, i32) {
    %c0_i32 = arith.constant 0 : i32
    %c0_i32_0 = arith.constant 0 : i32
    return %arg0, %c0_i32, %arg1 : i32, i32, i32
  }
  func.func @transform_4(%arg0: i32, %arg1: i32) -> (i32, i32, i32) {
    %c0_i32 = arith.constant 0 : i32
    %c0_i32_0 = arith.constant 0 : i32
    return %arg0, %c0_i32, %arg1 : i32, i32, i32
  }
}

</mosaic_0001>

<llo_original>
// kernel: rgb_decoder_vray_shift.1
$region0: #{rgb_decoder_vray_shift.1}
  #allocation0 [shape = 'u32[]', space=smem, size = 0x4, offset = 0x4, fixed_abs, tag = 'smem constant byte address 0x4 - core index']
  #allocation1 [shape = 'u32[144,128]{1,0:T(1,128)}', space=vmem, size = 0x12000, scoped, tag = 'internal scratch']
  %s0 = inlined_call_operand.vmem [shape: f32[3,9], index: 0, kind: input, shape index: {}]
  %s1 = inlined_call_operand.vmem [shape: f32[3,6], index: 1, kind: input, shape index: {}]
  %s2 = inlined_call_operand.vmem [shape: f32[2,9,256], index: 2, kind: input, shape index: {}]
  %s3 = inlined_call_operand.vmem [shape: f32[2,6,256], index: 3, kind: input, shape index: {}]
  %s4 = inlined_call_operand.vmem [shape: f32[2,3,256], index: 4, kind: output, shape index: {}]
  %s5 = sld [smem:[#allocation0]]
  $region49: #{rgb_decoder_vray_shift.1} parent=0
    _
  %s7 = ssub.s32 1, %s5
  %s8 = scalar_select 0, %s7, %s5
  loop: start=0, step=1, limit=4
  $region2: #{rgb_decoder_vray_shift.1} parent=0 // loop_pre_header
    _
  $region3: #{rgb_decoder_vray_shift.1} parent=0 // loop_header
    %s10 = sphi 0, %s14
    %p11 = scmp.ge.s32.totalorder %s10, 4
    %s17 = sphi 0, %s29
    %s18 = sphi 0, %s25
    %s19 = sphi 0, %s17
    %s20 = sphi 0, %s18
    %s21 = sphi 0, %s19
    %s22 = sphi 0, %s20
    %s30 = sphi 0, %s30
    %s32 = sphi 0, %s30
    %s33 = sphi 0, %s32
    %s47 = sphi 0, %s33
    %s51 = sphi 0, %s51
    %s53 = sphi 0, %s51
    %s54 = sphi 0, %s53
    %s68 = sphi 0, %s54
    %s76 = sphi 0, %s78
    %s79 = sphi 0, %s76
    %s80 = sphi 0, %s79
    %s96 = sphi 0, %s80
    %s104 = sphi 0, %s106
    %s107 = sphi 0, %s104
    %s108 = sphi 0, %s107
    %s124 = sphi 0, %s108
    %s132 = sphi 0, %s134
    %s135 = sphi 0, %s132
    %s136 = sphi 0, %s135
    %s152 = sphi 0, %s136
  $region4: #{rgb_decoder_vray_shift.1} parent=0 // loop_header_branch
    %13 = sbr.rel (%p11) target = $region8
  $region5: #{rgb_decoder_vray_shift.1} parent=0 // loop_body
    %s15 = ssub.s32 %s10, 1
    %s16 = ssub.s32 %s10, 2
    %s23 = sadd.s32 1, %s18
    %p24 = scmp.ge.s32.totalorder %s23, 1
    %s25 = scalar_select %p24, 0, %s23
    %s26 = sadd.s32 1, %s17
    %s27 = scalar_select %p24, %s26, %s17
    %p28 = scmp.ge.s32.totalorder %s27, 2
    %s29 = scalar_select %p28, 0, %s27
    %s31 = sadd.s32 %s30, 1
    %p34 = scmp.eq.s32.totalorder %s10, 1
    %p35 = scmp.ne.s32.totalorder %s30, %s32
    %p36 = scmp.eq.s32.totalorder %s10, 0
    %p37 = por %p35, %p36
    %p38 = scmp.ne.s32.totalorder %s30, %s32
    %p39 = scmp.eq.s32.totalorder %s15, 1
    %p40 = por %p38, %p39
    %p41 = scmp.ne.s32.totalorder %s32, %s33
    %p42 = scmp.eq.s32.totalorder %s15, 0
    %p43 = por %p41, %p42
    %p44 = scmp.ne.s32.totalorder %s32, %s33
    %p45 = scmp.eq.s32.totalorder %s16, 1
    %p46 = por %p44, %p45
    %p48 = scmp.ne.s32.totalorder %s33, %s47
    %p49 = scmp.eq.s32.totalorder %s16, 0
    %p50 = por %p48, %p49
    %s52 = sadd.s32 %s51, 1
    %p55 = scmp.eq.s32.totalorder %s10, 1
    %p56 = scmp.ne.s32.totalorder %s51, %s53
    %p57 = scmp.eq.s32.totalorder %s10, 0
    %p58 = por %p56, %p57
    %p59 = scmp.ne.s32.totalorder %s51, %s53
    %p60 = scmp.eq.s32.totalorder %s15, 1
    %p61 = por %p59, %p60
    %p62 = scmp.ne.s32.totalorder %s53, %s54
    %p63 = scmp.eq.s32.totalorder %s15, 0
    %p64 = por %p62, %p63
    %p65 = scmp.ne.s32.totalorder %s53, %s54
    %p66 = scmp.eq.s32.totalorder %s16, 1
    %p67 = por %p65, %p66
    %p69 = scmp.ne.s32.totalorder %s54, %s68
    %p70 = scmp.eq.s32.totalorder %s16, 0
    %p71 = por %p69, %p70
    %s72 = ssub.s32 %s17, %s29
    %s73 = ssub.s32 %s18, %s25
    %s74 = sor.u32 %s72, %s73
    %p75 = scmp.eq.s32.totalorder %s74, 0
    %s77 = sadd.s32 %s76, 1
    %s78 = scalar_select %p75, %s76, %s77
    %p81 = pneg %p75
    %p82 = scmp.eq.s32.totalorder %s10, 1
    %p83 = por %p81, %p82
    %p84 = scmp.ne.s32.totalorder %s76, %s79
    %p85 = scmp.eq.s32.totalorder %s10, 0
    %p86 = por %p84, %p85
    %p87 = scmp.ne.s32.totalorder %s76, %s79
    %p88 = scmp.eq.s32.totalorder %s15, 1
    %p89 = por %p87, %p88
    %p90 = scmp.ne.s32.totalorder %s79, %s80
    %p91 = scmp.eq.s32.totalorder %s15, 0
    %p92 = por %p90, %p91
    %p93 = scmp.ne.s32.totalorder %s79, %s80
    %p94 = scmp.eq.s32.totalorder %s16, 1
    %p95 = por %p93, %p94
    %p97 = scmp.ne.s32.totalorder %s80, %s96
    %p98 = scmp.eq.s32.totalorder %s16, 0
    %p99 = por %p97, %p98
    %s100 = ssub.s32 %s17, %s29
    %s101 = ssub.s32 %s18, %s25
    %s102 = sor.u32 %s100, %s101
    %p103 = scmp.eq.s32.totalorder %s102, 0
    %s105 = sadd.s32 %s104, 1
    %s106 = scalar_select %p103, %s104, %s105
    %p109 = pneg %p103
    %p110 = scmp.eq.s32.totalorder %s10, 1
    %p111 = por %p109, %p110
    %p112 = scmp.ne.s32.totalorder %s104, %s107
    %p113 = scmp.eq.s32.totalorder %s10, 0
    %p114 = por %p112, %p113
    %p115 = scmp.ne.s32.totalorder %s104, %s107
    %p116 = scmp.eq.s32.totalorder %s15, 1
    %p117 = por %p115, %p116
    %p118 = scmp.ne.s32.totalorder %s107, %s108
    %p119 = scmp.eq.s32.totalorder %s15, 0
    %p120 = por %p118, %p119
    %p121 = scmp.ne.s32.totalorder %s107, %s108
    %p122 = scmp.eq.s32.totalorder %s16, 1
    %p123 = por %p121, %p122
    %p125 = scmp.ne.s32.totalorder %s108, %s124
    %p126 = scmp.eq.s32.totalorder %s16, 0
    %p127 = por %p125, %p126
    %s128 = ssub.s32 %s17, %s29
    %s129 = ssub.s32 %s18, %s25
    %s130 = sor.u32 %s128, %s129
    %p131 = scmp.eq.s32.totalorder %s130, 0
    %s133 = sadd.s32 %s132, 1
    %s134 = scalar_select %p131, %s132, %s133
    %p137 = pneg %p131
    %p138 = scmp.eq.s32.totalorder %s10, 1
    %p139 = por %p137, %p138
    %p140 = scmp.ne.s32.totalorder %s132, %s135
    %p141 = scmp.eq.s32.totalorder %s10, 0
    %p142 = por %p140, %p141
    %p143 = scmp.ne.s32.totalorder %s132, %s135
    %p144 = scmp.eq.s32.totalorder %s15, 1
    %p145 = por %p143, %p144
    %p146 = scmp.ne.s32.totalorder %s135, %s136
    %p147 = scmp.eq.s32.totalorder %s15, 0
    %p148 = por %p146, %p147
    %p149 = scmp.ne.s32.totalorder %s135, %s136
    %p150 = scmp.eq.s32.totalorder %s16, 1
    %p151 = por %p149, %p150
    %p153 = scmp.ne.s32.totalorder %s136, %s152
    %p154 = scmp.eq.s32.totalorder %s16, 0
    %p155 = por %p153, %p154
    %p156 = scmp.le.s32.totalorder 1, %s10
    %p157 = scmp.lt.s32.totalorder %s10, 3
    %p158 = pnand %p156, %p157
    %p159 = pneg %p158
    // Predicated region
    $region9: #{rgb_decoder_vray_shift.1} parent=5 // pred_check
      _
    $region10: #{rgb_decoder_vray_shift.1} parent=5 // pred_check_branch
      %161 = sbr.rel (%p158) target = $region12
    $region11: #{rgb_decoder_vray_shift.1} parent=5 // pred_region
      %s162 = ssub.s32 %s10, 1
      // Predicated region
      $region13: #{rgb_decoder_vray_shift.1} parent=11 // pred_check
        %p163 = pneg %p43
      $region14: #{rgb_decoder_vray_shift.1} parent=11 // pred_check_branch
        %165 = sbr.rel (%p163) target = $region16
      $region15: #{rgb_decoder_vray_shift.1} parent=11 // pred_region
        _
      $region16: #{rgb_decoder_vray_shift.1} parent=11 // pred_fallthru
        _
      // Predicated region
      $region17: #{rgb_decoder_vray_shift.1} parent=11 // pred_check
        %p166 = pneg %p64
      $region18: #{rgb_decoder_vray_shift.1} parent=11 // pred_check_branch
        %168 = sbr.rel (%p166) target = $region20
      $region19: #{rgb_decoder_vray_shift.1} parent=11 // pred_region
        _
      $region20: #{rgb_decoder_vray_shift.1} parent=11 // pred_fallthru
        _
    $region12: #{rgb_decoder_vray_shift.1} parent=5 // pred_fallthru
      _
    %p169 = scmp.lt.s32.totalorder %s10, 2
    // Predicated region
    $region21: #{rgb_decoder_vray_shift.1} parent=5 // pred_check
      %p170 = pneg %p169
    $region22: #{rgb_decoder_vray_shift.1} parent=5 // pred_check_branch
      %172 = sbr.rel (%p170) target = $region24
    $region23: #{rgb_decoder_vray_shift.1} parent=5 // pred_region
      // Predicated region
      $region25: #{rgb_decoder_vray_shift.1} parent=23 // pred_check
        %p173 = pneg %p86
      $region26: #{rgb_decoder_vray_shift.1} parent=23 // pred_check_branch
        %175 = sbr.rel (%p173) target = $region28
      $region27: #{rgb_decoder_vray_shift.1} parent=23 // pred_region
        %s176 = smul.u32 2, %s18
        %p177 = scmp.lt.s32.totalorder %s17, 1
        %s178 = scalar_select %p177, %s17, 1
        %p179 = scmp.lt.s32.totalorder %s176, 1
        %s180 = scalar_select %p179, %s176, 1
        %s181 = smul.addr %s178, 4
        %s182 = sadd.s32 %s180, %s181
        %s183 = smul.addr %s182, 8
        %s184 = scalar_lea.vmem %s2, %s183
        %s185 = smul.u32 2, %s18
      $region28: #{rgb_decoder_vray_shift.1} parent=23 // pred_fallthru
        _
      // Predicated region
      $region29: #{rgb_decoder_vray_shift.1} parent=23 // pred_check
        %p186 = pneg %p114
      $region30: #{rgb_decoder_vray_shift.1} parent=23 // pred_check_branch
        %188 = sbr.rel (%p186) target = $region32
      $region31: #{rgb_decoder_vray_shift.1} parent=23 // pred_region
        %s189 = smul.u32 2, %s18
        %p190 = scmp.lt.s32.totalorder %s17, 1
        %s191 = scalar_select %p190, %s17, 1
        %p192 = scmp.lt.s32.totalorder %s189, 1
        %s193 = scalar_select %p192, %s189, 1
        %s194 = smul.addr %s191, 2
        %s195 = sadd.s32 %s193, %s194
        %s196 = smul.addr %s195, 8
        %s197 = scalar_lea.vmem %s3, %s196
        %s198 = smul.u32 2, %s18
      $region32: #{rgb_decoder_vray_shift.1} parent=23 // pred_fallthru
        _
    $region24: #{rgb_decoder_vray_shift.1} parent=5 // pred_fallthru
      _
    %p199 = scmp.le.s32.totalorder 1, %s10
    %p200 = scmp.lt.s32.totalorder %s10, 3
    %p201 = pnand %p199, %p200
    %p202 = pneg %p201
    // Predicated region
    $region33: #{rgb_decoder_vray_shift.1} parent=5 // pred_check
      _
    $region34: #{rgb_decoder_vray_shift.1} parent=5 // pred_check_branch
      %204 = sbr.rel (%p201) target = $region36
    $region35: #{rgb_decoder_vray_shift.1} parent=5 // pred_region
      %s205 = ssub.s32 %s10, 1
      %p206 = pneg %p43
      %p207 = pneg %p40
      %p208 = pneg %p64
      %p209 = pneg %p61
      %s210 = smul.u32 2, %s20
      %p211 = scmp.lt.s32.totalorder %s19, 1
      %s212 = scalar_select %p211, %s19, 1
      %p213 = scmp.lt.s32.totalorder %s210, 1
      %s214 = scalar_select %p213, %s210, 1
      %s215 = smul.addr %s212, 4
      %s216 = sadd.s32 %s214, %s215
      %s217 = smul.addr %s216, 8
      %s218 = scalar_lea.vmem %s2, %s217
      %p219 = pneg %p92
      %p220 = pneg %p89
      %s221 = smul.u32 2, %s20
      %p222 = scmp.lt.s32.totalorder %s19, 1
      %s223 = scalar_select %p222, %s19, 1
      %p224 = scmp.lt.s32.totalorder %s221, 1
      %s225 = scalar_select %p224, %s221, 1
      %s226 = smul.addr %s223, 2
      %s227 = sadd.s32 %s225, %s226
      %s228 = smul.addr %s227, 8
      %s229 = scalar_lea.vmem %s3, %s228
      %p230 = pneg %p120
      %p231 = pneg %p117
      %p232 = pneg %p148
      %p233 = pneg %p145
      %s234 = smul.u32 2, %s20
      %p235 = scmp.lt.s32.totalorder %s19, 1
      %s236 = scalar_select %p235, %s19, 1
      %p237 = scmp.lt.s32.totalorder %s234, 1
      %s238 = scalar_select %p237, %s234, 1
      %s239 = smul.addr %s236, 2
      %s240 = sadd.s32 %s238, %s239
      %s241 = smul.addr %s240, 4
      %s242 = scalar_lea.vmem %s4, %s241
      %s243 = smul.u32 2, %s20
      %p244 = scmp.lt.s32.totalorder %s19, 1
      %s245 = scalar_select %p244, %s19, 1
      %p246 = scmp.lt.s32.totalorder %s243, 1
      %s247 = scalar_select %p246, %s243, 1
      %s248 = smul.addr %s245, 4
      %s249 = sadd.s32 %s247, %s248
      %s250 = smul.addr %s249, 8
      %s251 = scalar_lea.vmem %s2, %s250
      %s252 = smul.u32 2, %s20
      %s253 = smul.u32 2, %s20
      %p254 = scmp.lt.s32.totalorder %s19, 1
      %s255 = scalar_select %p254, %s19, 1
      %p256 = scmp.lt.s32.totalorder %s253, 1
      %s257 = scalar_select %p256, %s253, 1
      %s258 = smul.addr %s255, 2
      %s259 = sadd.s32 %s257, %s258
      %s260 = smul.addr %s259, 8
      %s261 = scalar_lea.vmem %s3, %s260
      %s262 = smul.u32 2, %s20
      %s263 = smul.u32 2, %s20
      %p264 = scmp.lt.s32.totalorder %s19, 1
      %s265 = scalar_select %p264, %s19, 1
      %p266 = scmp.lt.s32.totalorder %s263, 1
      %s267 = scalar_select %p266, %s263, 1
      %s268 = smul.addr %s265, 2
      %s269 = sadd.s32 %s267, %s268
      %s270 = smul.addr %s269, 4
      %s271 = scalar_lea.vmem %s4, %s270
      %s272 = smul.u32 2, %s20
      %v273 = vld [vmem:[%s251] sm:$0xff]
      %v274 = vld [vmem:[%s251 + $0x8] sm:$0xff]
      %v275 = vld [vmem:[%s251 + $0x10] sm:$0x1]
      %v276 = vld [vmem:[%s251 + $0x18] sm:$0x1]
      %v277 = vld [vmem:[%s261] sm:$0x3f]
      %v278 = vld [vmem:[%s261 + $0x8] sm:$0x3f]
      %v279 = vld [vmem:[%s0] sm:$0x7]
      %v280 = vld [vmem:[%s1] sm:$0x7]
      %vm281 = vcmask 48128
      %v283 = vsel %vm281, %v280, 0
      %vm285 = vcmask 1045504
      %v287 = vsel %vm285, %v277, 0
      %v290 = vsel %vm285, %v278, 0
      %292 = vmatprep.subr.mxu0 %v290
      %293 = vmatpush1.msra.mxu0 %v287
      %294 = vmatprep.subr.mxu0 0.0
      %295 = vmatpush1.msra.mxu0 0.0
      %296 = vmatprep.subr.mxu0 0.0
      %297 = vmatpush1.msra.mxu0 0.0
      %298 = vmatprep.subr.mxu0 0.0
      %299 = vmatpush1.msra.mxu0 0.0
      %300 = vmatprep.subr.mxu0 0.0
      %301 = vmatpush1.msra.mxu0 0.0
      %302 = vmatprep.subr.mxu0 0.0
      %303 = vmatpush1.msra.mxu0 0.0
      %304 = vmatprep.subr.mxu0 0.0
      %305 = vmatpush1.msra.mxu0 0.0
      %306 = vmatprep.subr.mxu0 0.0
      %307 = vmatpush1.msra.mxu0 0.0
      %308 = vmatprep.subr.mxu0 0.0
      %309 = vmatpush1.msra.mxu0 0.0
      %310 = vmatprep.subr.mxu0 0.0
      %311 = vmatpush1.msra.mxu0 0.0
      %312 = vmatprep.subr.mxu0 0.0
      %313 = vmatpush1.msra.mxu0 0.0
      %314 = vmatprep.subr.mxu0 0.0
      %315 = vmatpush1.msra.mxu0 0.0
      %316 = vmatprep.subr.mxu0 0.0
      %317 = vmatpush1.msra.mxu0 0.0
      %318 = vmatprep.subr.mxu0 0.0
      %319 = vmatpush1.msra.mxu0 0.0
      %320 = vmatprep.subr.mxu0 0.0
      %321 = vmatpush1.msra.mxu0 0.0
      %322 = vmatprep.subr.mxu0 0.0
      %323 = vmatpush1.msra.mxu0 0.0
      %324 = vmatprep.subr.mxu0 0.0
      %325 = vmatpush1.msra.mxu0 0.0
      %326 = vmatprep.subr.mxu0 0.0
      %327 = vmatpush1.msra.mxu0 0.0
      %328 = vmatprep.subr.mxu0 0.0
      %329 = vmatpush1.msra.mxu0 0.0
      %330 = vmatprep.subr.mxu0 0.0
      %331 = vmatpush1.msra.mxu0 0.0
      %332 = vmatprep.subr.mxu0 0.0
      %333 = vmatpush1.msra.mxu0 0.0
      %334 = vmatprep.subr.mxu0 0.0
      %335 = vmatpush1.msra.mxu0 0.0
      %336 = vmatprep.subr.mxu0 0.0
      %337 = vmatpush1.msra.mxu0 0.0
      %338 = vmatprep.subr.mxu0 0.0
      %339 = vmatpush1.msra.mxu0 0.0
      %340 = vmatprep.subr.mxu0 0.0
      %341 = vmatpush1.msra.mxu0 0.0
      %342 = vmatprep.subr.mxu0 0.0
      %343 = vmatpush1.msra.mxu0 0.0
      %344 = vmatprep.subr.mxu0 0.0
      %345 = vmatpush1.msra.mxu0 0.0
      %346 = vmatprep.subr.mxu0 0.0
      %347 = vmatpush1.msra.mxu0 0.0
      %348 = vmatprep.subr.mxu0 0.0
      %349 = vmatpush1.msra.mxu0 0.0
      %350 = vmatprep.subr.mxu0 0.0
      %351 = vmatpush1.msra.mxu0 0.0
      %352 = vmatprep.subr.mxu0 0.0
      %353 = vmatpush1.msra.mxu0 0.0
      %354 = vmatprep.subr.mxu0 0.0
      %355 = vmatpush1.msra.mxu0 0.0
      %356 = vmatprep.mubr.f32.mxu0 0.0
      %357 = vmatmul.mubr.f32.gmra.mrb[0].mxu0 %v283
      %v358 = vpop.f32.mrb[0].mxu0
      %v359 = vadd.f32 0.0, %v358
      %v360 = vpop.f32.mrb[0].mxu0
      %v361 = vadd.f32 0.0, %v360
      %362 = vdwg.mxu0
      %vm363 = vcmask 72704
      %v365 = vsel %vm363, %v279, 0
      %vm367 = vcmask 1040384
      %v369 = vsel %vm367, %v275, 0
      %v372 = vsel %vm367, %v276, 0
      %374 = vmatprep.subr.mxu0 %v274
      %375 = vmatpush1.msra.mxu0 %v273
      %376 = vmatprep.subr.mxu0 %v372
      %377 = vmatpush1.msra.mxu0 %v369
      %378 = vmatprep.subr.mxu0 0.0
      %379 = vmatpush1.msra.mxu0 0.0
      %380 = vmatprep.subr.mxu0 0.0
      %381 = vmatpush1.msra.mxu0 0.0
      %382 = vmatprep.subr.mxu0 0.0
      %383 = vmatpush1.msra.mxu0 0.0
      %384 = vmatprep.subr.mxu0 0.0
      %385 = vmatpush1.msra.mxu0 0.0
      %386 = vmatprep.subr.mxu0 0.0
      %387 = vmatpush1.msra.mxu0 0.0
      %388 = vmatprep.subr.mxu0 0.0
      %389 = vmatpush1.msra.mxu0 0.0
      %390 = vmatprep.subr.mxu0 0.0
      %391 = vmatpush1.msra.mxu0 0.0
      %392 = vmatprep.subr.mxu0 0.0
      %393 = vmatpush1.msra.mxu0 0.0
      %394 = vmatprep.subr.mxu0 0.0
      %395 = vmatpush1.msra.mxu0 0.0
      %396 = vmatprep.subr.mxu0 0.0
      %397 = vmatpush1.msra.mxu0 0.0
      %398 = vmatprep.subr.mxu0 0.0
      %399 = vmatpush1.msra.mxu0 0.0
      %400 = vmatprep.subr.mxu0 0.0
      %401 = vmatpush1.msra.mxu0 0.0
      %402 = vmatprep.subr.mxu0 0.0
      %403 = vmatpush1.msra.mxu0 0.0
      %404 = vmatprep.subr.mxu0 0.0
      %405 = vmatpush1.msra.mxu0 0.0
      %406 = vmatprep.subr.mxu0 0.0
      %407 = vmatpush1.msra.mxu0 0.0
      %408 = vmatprep.subr.mxu0 0.0
      %409 = vmatpush1.msra.mxu0 0.0
      %410 = vmatprep.subr.mxu0 0.0
      %411 = vmatpush1.msra.mxu0 0.0
      %412 = vmatprep.subr.mxu0 0.0
      %413 = vmatpush1.msra.mxu0 0.0
      %414 = vmatprep.subr.mxu0 0.0
      %415 = vmatpush1.msra.mxu0 0.0
      %416 = vmatprep.subr.mxu0 0.0
      %417 = vmatpush1.msra.mxu0 0.0
      %418 = vmatprep.subr.mxu0 0.0
      %419 = vmatpush1.msra.mxu0 0.0
      %420 = vmatprep.subr.mxu0 0.0
      %421 = vmatpush1.msra.mxu0 0.0
      %422 = vmatprep.subr.mxu0 0.0
      %423 = vmatpush1.msra.mxu0 0.0
      %424 = vmatprep.subr.mxu0 0.0
      %425 = vmatpush1.msra.mxu0 0.0
      %426 = vmatprep.subr.mxu0 0.0
      %427 = vmatpush1.msra.mxu0 0.0
      %428 = vmatprep.subr.mxu0 0.0
      %429 = vmatpush1.msra.mxu0 0.0
      %430 = vmatprep.subr.mxu0 0.0
      %431 = vmatpush1.msra.mxu0 0.0
      %432 = vmatprep.subr.mxu0 0.0
      %433 = vmatpush1.msra.mxu0 0.0
      %434 = vmatprep.subr.mxu0 0.0
      %435 = vmatpush1.msra.mxu0 0.0
      %436 = vmatprep.subr.mxu0 0.0
      %437 = vmatpush1.msra.mxu0 0.0
      %438 = vmatprep.mubr.f32.mxu0 0.0
      %439 = vmatmul.mubr.f32.gmra.mrb[0].mxu0 %v365
      %v440 = vpop.f32.mrb[0].mxu0
      %v441 = vadd.f32 %v359, %v440
      %v442 = vpop.f32.mrb[0].mxu0
      %v443 = vadd.f32 %v361, %v442
      %444 = vdwg.mxu0
      %v445 = vsub.f32 0.0, %v441
      %v446 = vsub.f32 0.0, %v443
      %v447 = vmul.f32 %v445, 1.442695
      %v448 = vpow.pop %v447
      %v449 = vmul.f32 %v446, 1.442695
      %v450 = vpow.pop %v449
      %v451 = vadd.f32 %v448, 1.0
      %v452 = vadd.f32 %v450, 1.0
      %v453 = vrcp.pop %v451
      %v454 = vrcp.pop %v452
      %v457 = vcombine.low %v453, %v454
      %459 = vst [vmem:[%s271] sm:$0x77] %v457
      %s460 = smul.u32 2, %s20
      %p461 = scmp.lt.s32.totalorder %s19, 1
      %s462 = scalar_select %p461, %s19, 1
      %p463 = scmp.lt.s32.totalorder %s460, 1
      %s464 = scalar_select %p463, %s460, 1
      %s465 = smul.addr %s462, 2
      %s466 = sadd.s32 %s464, %s465
      %s467 = smul.addr %s466, 4
      %s468 = scalar_lea.vmem %s4, %s467
      // Predicated region
      $region37: #{rgb_decoder_vray_shift.1} parent=35 // pred_check
        %p469 = pneg %p145
      $region38: #{rgb_decoder_vray_shift.1} parent=35 // pred_check_branch
        %471 = sbr.rel (%p469) target = $region40
      $region39: #{rgb_decoder_vray_shift.1} parent=35 // pred_region
        %s472 = smul.u32 2, %s20
      $region40: #{rgb_decoder_vray_shift.1} parent=35 // pred_fallthru
        _
    $region36: #{rgb_decoder_vray_shift.1} parent=5 // pred_fallthru
      _
    %p473 = scmp.le.s32.totalorder 2, %s10
    // Predicated region
    $region41: #{rgb_decoder_vray_shift.1} parent=5 // pred_check
      %p474 = pneg %p473
    $region42: #{rgb_decoder_vray_shift.1} parent=5 // pred_check_branch
      %476 = sbr.rel (%p474) target = $region44
    $region43: #{rgb_decoder_vray_shift.1} parent=5 // pred_region
      %s477 = ssub.s32 %s10, 2
      // Predicated region
      $region45: #{rgb_decoder_vray_shift.1} parent=43 // pred_check
        %p478 = pneg %p151
      $region46: #{rgb_decoder_vray_shift.1} parent=43 // pred_check_branch
        %480 = sbr.rel (%p478) target = $region48
      $region47: #{rgb_decoder_vray_shift.1} parent=43 // pred_region
        %s481 = smul.u32 2, %s22
        %p482 = scmp.lt.s32.totalorder %s21, 1
        %s483 = scalar_select %p482, %s21, 1
        %p484 = scmp.lt.s32.totalorder %s481, 1
        %s485 = scalar_select %p484, %s481, 1
        %s486 = smul.addr %s483, 2
        %s487 = sadd.s32 %s485, %s486
        %s488 = smul.addr %s487, 4
        %s489 = scalar_lea.vmem %s4, %s488
      $region48: #{rgb_decoder_vray_shift.1} parent=43 // pred_fallthru
        _
    $region44: #{rgb_decoder_vray_shift.1} parent=5 // pred_fallthru
      _
  $region6: #{rgb_decoder_vray_shift.1} parent=0 // loop_footer
    %s14 = sadd.s32 1, %s10
  $region7: #{rgb_decoder_vray_shift.1} parent=0 // loop_footer_branch
    %9 = sbr.rel target = $region3
  $region8: #{rgb_decoder_vray_shift.1} parent=0 // loop_exit
    _

</llo_original>
